<compile_context>
chip_gen: v5e
topology: v5e:2x2
jax: 0.10.0
libtpu: 0.0.40
codegen_flags: <defaults>
</compile_context>

<pallas_src>
import jax
import jax.numpy as jnp
from jax.experimental import pallas as pl
from jax.experimental.pallas import tpu as pltpu


def ai_network_kernel(x_ref, w1_ref, b1_ref, w2_ref, b2_ref, out_ref):
    # x:   (TB, 3)   batch-major block taken straight from the (B, 3) input
    # w1:  (10, 3)   b1: (10, 1)     (PyTorch nn.Linear (out, in) layout)
    # w2:  (5, 10)   b2: (5, 1)      (all VMEM-resident, constant index_map)
    # out: (5, TB)   lane-dense (batch on the 128-wide lane axis)
    x = x_ref[...].astype(jnp.float32)
    w1 = w1_ref[...].astype(jnp.float32)
    w2 = w2_ref[...].astype(jnp.float32)

    # fc1 on the MXU: contract the 3-wide feature axis of both operands
    # (transposed-rhs matmul, same pattern as the attention 'bqd,bkd->bqk'),
    # producing a lane-dense (10, TB) activation -- this also performs the
    # batch-major -> lane-dense conversion so no wrapper transpose is needed.
    s1 = jnp.einsum("hk,bk->hb", w1, x,
                    preferred_element_type=jnp.float32,
                    precision=jax.lax.Precision.HIGHEST)
    s1 = jnp.maximum(s1 + b1_ref[...], 0.0)          # bias broadcast over lanes

    # fc2 on the MXU: standard (5,10) @ (10,TB), still lane-dense.
    s2 = jnp.einsum("oh,hb->ob", w2, s1,
                    preferred_element_type=jnp.float32,
                    precision=jax.lax.Precision.HIGHEST)
    out_ref[...] = (s2 + b2_ref[...]).astype(out_ref.dtype)
    # TODO(synk): the module's host-side `print(f's1 ...| s2 ...')` debug print
    # has no in-kernel equivalent and is intentionally omitted.


def _round_up(n, m):
    return ((n + m - 1) // m) * m


def ai_network_forward(x, w1, b1, w2, b2, *, tile_b=16384,
                       batch_major_output=True):
    """AI_Network forward pass.

    x : (B, 3) float
    w1: (10, 3), b1: (10,)   -- PyTorch nn.Linear (out_features, in_features)
    w2: (5, 10), b2: (5,)
    Returns (B, 5) float32 (or lane-dense (5, B) if batch_major_output=False).
    """
    B, in_f = x.shape            # in_f = 3
    hid = w1.shape[0]            # 10
    out_f = w2.shape[0]          # 5

    # Batch is padded only to a multiple of 128 lanes (no-op when already
    # aligned); the grid uses cdiv with a partial last block, so there is no
    # pad-to-tile-multiple tax for large tiles.
    b_pad = _round_up(B, 128)
    # Clamp the tile: (tile_b, 3) f32 input blocks are lane-padded to 128 in
    # VMEM (~512 B/row), so 32K lanes (~38 MiB double-buffered incl. output)
    # is the practical ceiling on v7x's 64 MiB VMEM.
    tile_b = max(128, min(_round_up(tile_b, 128), 32768, b_pad))
    n_blocks = pl.cdiv(b_pad, tile_b)
    # Keep >= 2 grid steps when the batch allows it so the "parallel" batch
    # axis can shard across the 2 TensorCores on v7x.
    if n_blocks < 2 and b_pad >= 256:
        tile_b = _round_up((b_pad + 1) // 2, 128)
        n_blocks = pl.cdiv(b_pad, tile_b)

    x_in = x if b_pad == B else jnp.pad(x, ((0, b_pad - B), (0, 0)))
    b1c = b1.reshape(hid, 1).astype(jnp.float32)
    b2c = b2.reshape(out_f, 1).astype(jnp.float32)

    resident = lambda shape: pl.BlockSpec(shape, lambda i: (0, 0))

    # Double-buffered input (lane-padded) + output tiles, plus slack for the
    # tiny resident weights; floor at the 32 MiB v6e/v7x default so v5e's
    # 16 MiB default never becomes the binding limit.
    vmem_bytes = 2 * (tile_b * 128 * 4) + 2 * (8 * tile_b * 4) + (2 << 20)
    vmem_bytes = int(min(max(vmem_bytes, 32 << 20), 64 << 20))

    out_t = pl.pallas_call(
        ai_network_kernel,
        out_shape=jax.ShapeDtypeStruct((out_f, b_pad), jnp.float32),
        grid=(n_blocks,),
        in_specs=[
            pl.BlockSpec((tile_b, in_f), lambda i: (i, 0)),   # x, tiled on batch
            resident((hid, in_f)),                            # W1 (VMEM-resident)
            resident((hid, 1)),                               # b1
            resident((out_f, hid)),                           # W2
            resident((out_f, 1)),                             # b2
        ],
        out_specs=pl.BlockSpec((out_f, tile_b), lambda i: (0, i)),
        compiler_params=pltpu.CompilerParams(
            dimension_semantics=("parallel",),
            vmem_limit_bytes=vmem_bytes),
    )(x_in, w1, b1c, w2, b2c)

    if batch_major_output:
        # PyTorch (B, 5) convention; drop the 128-alignment padding.
        return out_t.T[:B]
    # Lane-dense layout for consumers that can fuse/accept it (saves one
    # extra HBM read+write of the output).
    return out_t[:, :B]


def reference_forward(x, w1, b1, w2, b2):
    hi = jax.lax.Precision.HIGHEST
    s1 = jnp.maximum(jnp.dot(x, w1.T, precision=hi) + b1, 0.0)
    return jnp.dot(s1, w2.T, precision=hi) + b2


if __name__ == "__main__":
    key = jax.random.PRNGKey(0)
    k_x, k_w1, k_b1, k_w2, k_b2 = jax.random.split(key, 5)

    # PyTorch-style init: uniform(-1/sqrt(fan_in), 1/sqrt(fan_in)), (out, in) weights.
    def init_linear(kw, kb, fan_in, fan_out):
        bound = 1.0 / jnp.sqrt(jnp.float32(fan_in))
        w = jax.random.uniform(kw, (fan_out, fan_in), jnp.float32, -bound, bound)
        b = jax.random.uniform(kb, (fan_out,), jnp.float32, -bound, bound)
        return w, b

    w1, b1 = init_linear(k_w1, k_b1, 3, 10)
    w2, b2 = init_linear(k_w2, k_b2, 10, 5)

    # B=256 exercises the 2-block (megacore) path; B=200 exercises the
    # pad-to-128 / partial-batch path.
    for B in (256, 200):
        x = jax.random.normal(jax.random.fold_in(k_x, B), (B, 3),
                              dtype=jnp.float32)
        out = jax.block_until_ready(ai_network_forward(x, w1, b1, w2, b2))
        ref = reference_forward(x, w1, b1, w2, b2)
        assert out.shape == (B, 5), out.shape
        # Tolerance absorbs possible differences in MXU f32 pass counts
        # between the Pallas matmuls and the XLA reference.
        assert jnp.allclose(out, ref, atol=2e-3, rtol=2e-3), \
            float(jnp.max(jnp.abs(out - ref)))

    print("KERNEL_OK")
</pallas_src>

<mosaic_0001>
module attributes {stable_mosaic.version = 11 : i64} {
  func.func @ai_network_kernel(%arg0: i32, %arg1: memref<128x3xf32, #tpu.memory_space<vmem>>, %arg2: memref<10x3xf32, #tpu.memory_space<vmem>>, %arg3: memref<10x1xf32, #tpu.memory_space<vmem>>, %arg4: memref<5x10xf32, #tpu.memory_space<vmem>>, %arg5: memref<5x1xf32, #tpu.memory_space<vmem>>, %arg6: memref<5x128xf32, #tpu.memory_space<vmem>>) attributes {dimension_semantics = [#tpu.dimension_semantics<parallel>], iteration_bounds = array<i64: 2>, scalar_prefetch = 0 : i64, scratch_operands = 0 : i64, tpu.core_type = #tpu.core_type<tc>, window_params = [{transform_indices = @transform_0, window_bounds = array<i64: 128, 3>}, {pipeline_mode = #tpu.pipeline_mode<synchronous>, transform_indices = @transform_1, window_bounds = array<i64: 10, 3>}, {pipeline_mode = #tpu.pipeline_mode<synchronous>, transform_indices = @transform_2, window_bounds = array<i64: 10, 1>}, {pipeline_mode = #tpu.pipeline_mode<synchronous>, transform_indices = @transform_3, window_bounds = array<i64: 5, 10>}, {pipeline_mode = #tpu.pipeline_mode<synchronous>, transform_indices = @transform_4, window_bounds = array<i64: 5, 1>}, {transform_indices = @transform_5, window_bounds = array<i64: 5, 128>}]} {
    %c0 = arith.constant 0 : index
    %c0_0 = arith.constant 0 : index
    %0 = vector.load %arg1[%c0, %c0_0] : memref<128x3xf32, #tpu.memory_space<vmem>>, vector<128x3xf32>
    %c0_1 = arith.constant 0 : index
    %c0_2 = arith.constant 0 : index
    %1 = vector.load %arg2[%c0_1, %c0_2] : memref<10x3xf32, #tpu.memory_space<vmem>>, vector<10x3xf32>
    %c0_3 = arith.constant 0 : index
    %c0_4 = arith.constant 0 : index
    %2 = vector.load %arg4[%c0_3, %c0_4] : memref<5x10xf32, #tpu.memory_space<vmem>>, vector<5x10xf32>
    "tpu.trace_start"() <{level = 10 : i32, message = "hk,bk->hb"}> : () -> ()
    %cst = arith.constant dense<0.000000e+00> : vector<10x128xf32>
    %3 = tpu.matmul %1, %0, %cst {dimension_numbers = #tpu.dot_dimension_numbers<[1], [1], [0], [0], [0, 0, 1, 0], [], []>, precision = #tpu.contract_precision<fp32>} : vector<10x3xf32>, vector<128x3xf32>, vector<10x128xf32> -> vector<10x128xf32>
    "tpu.trace_stop"() : () -> ()
    %c0_5 = arith.constant 0 : index
    %c0_6 = arith.constant 0 : index
    %4 = vector.load %arg3[%c0_5, %c0_6] : memref<10x1xf32, #tpu.memory_space<vmem>>, vector<10x1xf32>
    %5 = vector.broadcast %4 : vector<10x1xf32> to vector<10x128xf32>
    %6 = arith.addf %3, %5 : vector<10x128xf32>
    %cst_7 = arith.constant 0.000000e+00 : f32
    %7 = vector.broadcast %cst_7 : f32 to vector<10x128xf32>
    %8 = arith.maximumf %6, %7 : vector<10x128xf32>
    "tpu.trace_start"() <{level = 10 : i32, message = "oh,hb->ob"}> : () -> ()
    %cst_8 = arith.constant dense<0.000000e+00> : vector<5x128xf32>
    %9 = tpu.matmul %2, %8, %cst_8 {dimension_numbers = #tpu.dot_dimension_numbers<[1], [0], [0], [1], [0, 0, 1, 1], [], []>, precision = #tpu.contract_precision<fp32>} : vector<5x10xf32>, vector<10x128xf32>, vector<5x128xf32> -> vector<5x128xf32>
    "tpu.trace_stop"() : () -> ()
    %c0_9 = arith.constant 0 : index
    %c0_10 = arith.constant 0 : index
    %10 = vector.load %arg5[%c0_9, %c0_10] : memref<5x1xf32, #tpu.memory_space<vmem>>, vector<5x1xf32>
    %11 = vector.broadcast %10 : vector<5x1xf32> to vector<5x128xf32>
    %12 = arith.addf %9, %11 : vector<5x128xf32>
    %c0_11 = arith.constant 0 : index
    %c0_12 = arith.constant 0 : index
    %13 = vector.load %arg6[%c0_11, %c0_12] : memref<5x128xf32, #tpu.memory_space<vmem>>, vector<5x128xf32>
    tpu.vector_store %arg6[%c0_11, %c0_12], %12 {strides = array<i32>} : memref<5x128xf32, #tpu.memory_space<vmem>>, vector<5x128xf32>,
    return
  }
  func.func @transform_0(%arg0: i32) -> (i32, i32) {
    %c0_i32 = arith.constant 0 : i32
    %c0_i32_0 = arith.constant 0 : i32
    return %arg0, %c0_i32 : i32, i32
  }
  func.func @transform_1(%arg0: i32) -> (i32, i32) {
    %c0_i32 = arith.constant 0 : i32
    %c0_i32_0 = arith.constant 0 : i32
    %c0_i32_1 = arith.constant 0 : i32
    return %c0_i32, %c0_i32_0 : i32, i32
  }
  func.func @transform_2(%arg0: i32) -> (i32, i32) {
    %c0_i32 = arith.constant 0 : i32
    %c0_i32_0 = arith.constant 0 : i32
    %c0_i32_1 = arith.constant 0 : i32
    return %c0_i32, %c0_i32_0 : i32, i32
  }
  func.func @transform_3(%arg0: i32) -> (i32, i32) {
    %c0_i32 = arith.constant 0 : i32
    %c0_i32_0 = arith.constant 0 : i32
    %c0_i32_1 = arith.constant 0 : i32
    return %c0_i32, %c0_i32_0 : i32, i32
  }
  func.func @transform_4(%arg0: i32) -> (i32, i32) {
    %c0_i32 = arith.constant 0 : i32
    %c0_i32_0 = arith.constant 0 : i32
    %c0_i32_1 = arith.constant 0 : i32
    return %c0_i32, %c0_i32_0 : i32, i32
  }
  func.func @transform_5(%arg0: i32) -> (i32, i32) {
    %c0_i32 = arith.constant 0 : i32
    %c0_i32_0 = arith.constant 0 : i32
    return %c0_i32, %arg0 : i32, i32
  }
}

</mosaic_0001>

<llo_original>
// kernel: tpu_custom_call.1
$region0: #{tpu_custom_call.1}
  #allocation0 [shape = 'u32[]', space=smem, size = 0x4, offset = 0x4, fixed_abs, tag = 'smem constant byte address 0x4 - core index']
  #allocation1 [shape = 'u32[72,128]{1,0:T(1,128)}', space=vmem, size = 0x9000, scoped, tag = 'internal scratch']
  %s0 = inlined_call_operand.vmem [shape: f32[256,3], index: 0, kind: input, shape index: {}]
  %s1 = inlined_call_operand.vmem [shape: f32[10,3], index: 1, kind: input, shape index: {}]
  %s2 = inlined_call_operand.vmem [shape: f32[10,1], index: 2, kind: input, shape index: {}]
  %s3 = inlined_call_operand.vmem [shape: f32[5,10], index: 3, kind: input, shape index: {}]
  %s4 = inlined_call_operand.vmem [shape: f32[5,1], index: 4, kind: input, shape index: {}]
  %s5 = inlined_call_operand.hbm [shape: f32[5,256], index: 5, kind: output, shape index: {}]
  %s6 = sld [smem:[#allocation0]]
  $region53: #{tpu_custom_call.1} parent=0
    _
  %s8 = ssub.s32 1, %s6
  %s9 = scalar_select 0, %s8, %s6
  $region1: #{tpu_custom_call.1} parent=0
    #allocation2 [shape = 'u8[8192]{0}', space=vmem, size = 0x2000, scoped, tag = 'output window, operand 0']
    #allocation3 [shape = 's32[2]{0}', space=sflag, size = 0x8, scoped, tag = 'scoped memory for tpu_custom_call.1']
    %10 = vsyncpa [#allocation3], 0
    %s11 = scalar_lea.sflag [#allocation3], 1
    %12 = vsyncpa %s11, 0
    loop: start=0, step=1, limit=4
    $region2: #{tpu_custom_call.1} parent=1 // loop_pre_header
      _
    $region3: #{tpu_custom_call.1} parent=1 // loop_header
      %s14 = sphi 0, %s18
      %p15 = scmp.ge.s32.totalorder %s14, 4
      %s24 = sphi 0, %s26
      %s27 = sphi 0, %s24
      %s28 = sphi 0, %s27
      %s44 = sphi 0, %s28
      %s48 = sphi 0, %s48
      %s50 = sphi 0, %s48
      %s51 = sphi 0, %s50
      %s65 = sphi 0, %s51
      %s69 = sphi 0, %s69
      %s71 = sphi 0, %s69
      %s72 = sphi 0, %s71
      %s86 = sphi 0, %s72
      %s90 = sphi 0, %s90
      %s92 = sphi 0, %s90
      %s93 = sphi 0, %s92
      %s107 = sphi 0, %s93
      %s111 = sphi 0, %s111
      %s113 = sphi 0, %s111
      %s114 = sphi 0, %s113
      %s128 = sphi 0, %s114
      %s134 = sphi 0, %s136
      %s137 = sphi 0, %s134
      %s138 = sphi 0, %s137
      %s154 = sphi 0, %s138
    $region4: #{tpu_custom_call.1} parent=1 // loop_header_branch
      %17 = sbr.rel (%p15) target = $region8
    $region5: #{tpu_custom_call.1} parent=1 // loop_body
      %s19 = ssub.s32 %s14, 1
      %s20 = ssub.s32 %s14, 2
      %s21 = sadd.s32 %s14, 1
      %s22 = ssub.s32 %s14, %s21
      %p23 = scmp.eq.s32.totalorder %s22, 0
      %s25 = sadd.s32 %s24, 1
      %s26 = scalar_select %p23, %s24, %s25
      %p29 = pneg %p23
      %p30 = scmp.eq.s32.totalorder %s14, 1
      %p31 = por %p29, %p30
      %p32 = scmp.ne.s32.totalorder %s24, %s27
      %p33 = scmp.eq.s32.totalorder %s14, 0
      %p34 = por %p32, %p33
      %p35 = scmp.ne.s32.totalorder %s24, %s27
      %p36 = scmp.eq.s32.totalorder %s19, 1
      %p37 = por %p35, %p36
      %p38 = scmp.ne.s32.totalorder %s27, %s28
      %p39 = scmp.eq.s32.totalorder %s19, 0
      %p40 = por %p38, %p39
      %p41 = scmp.ne.s32.totalorder %s27, %s28
      %p42 = scmp.eq.s32.totalorder %s20, 1
      %p43 = por %p41, %p42
      %p45 = scmp.ne.s32.totalorder %s28, %s44
      %p46 = scmp.eq.s32.totalorder %s20, 0
      %p47 = por %p45, %p46
      %s49 = sadd.s32 %s48, 1
      %p52 = scmp.eq.s32.totalorder %s14, 1
      %p53 = scmp.ne.s32.totalorder %s48, %s50
      %p54 = scmp.eq.s32.totalorder %s14, 0
      %p55 = por %p53, %p54
      %p56 = scmp.ne.s32.totalorder %s48, %s50
      %p57 = scmp.eq.s32.totalorder %s19, 1
      %p58 = por %p56, %p57
      %p59 = scmp.ne.s32.totalorder %s50, %s51
      %p60 = scmp.eq.s32.totalorder %s19, 0
      %p61 = por %p59, %p60
      %p62 = scmp.ne.s32.totalorder %s50, %s51
      %p63 = scmp.eq.s32.totalorder %s20, 1
      %p64 = por %p62, %p63
      %p66 = scmp.ne.s32.totalorder %s51, %s65
      %p67 = scmp.eq.s32.totalorder %s20, 0
      %p68 = por %p66, %p67
      %s70 = sadd.s32 %s69, 1
      %p73 = scmp.eq.s32.totalorder %s14, 1
      %p74 = scmp.ne.s32.totalorder %s69, %s71
      %p75 = scmp.eq.s32.totalorder %s14, 0
      %p76 = por %p74, %p75
      %p77 = scmp.ne.s32.totalorder %s69, %s71
      %p78 = scmp.eq.s32.totalorder %s19, 1
      %p79 = por %p77, %p78
      %p80 = scmp.ne.s32.totalorder %s71, %s72
      %p81 = scmp.eq.s32.totalorder %s19, 0
      %p82 = por %p80, %p81
      %p83 = scmp.ne.s32.totalorder %s71, %s72
      %p84 = scmp.eq.s32.totalorder %s20, 1
      %p85 = por %p83, %p84
      %p87 = scmp.ne.s32.totalorder %s72, %s86
      %p88 = scmp.eq.s32.totalorder %s20, 0
      %p89 = por %p87, %p88
      %s91 = sadd.s32 %s90, 1
      %p94 = scmp.eq.s32.totalorder %s14, 1
      %p95 = scmp.ne.s32.totalorder %s90, %s92
      %p96 = scmp.eq.s32.totalorder %s14, 0
      %p97 = por %p95, %p96
      %p98 = scmp.ne.s32.totalorder %s90, %s92
      %p99 = scmp.eq.s32.totalorder %s19, 1
      %p100 = por %p98, %p99
      %p101 = scmp.ne.s32.totalorder %s92, %s93
      %p102 = scmp.eq.s32.totalorder %s19, 0
      %p103 = por %p101, %p102
      %p104 = scmp.ne.s32.totalorder %s92, %s93
      %p105 = scmp.eq.s32.totalorder %s20, 1
      %p106 = por %p104, %p105
      %p108 = scmp.ne.s32.totalorder %s93, %s107
      %p109 = scmp.eq.s32.totalorder %s20, 0
      %p110 = por %p108, %p109
      %s112 = sadd.s32 %s111, 1
      %p115 = scmp.eq.s32.totalorder %s14, 1
      %p116 = scmp.ne.s32.totalorder %s111, %s113
      %p117 = scmp.eq.s32.totalorder %s14, 0
      %p118 = por %p116, %p117
      %p119 = scmp.ne.s32.totalorder %s111, %s113
      %p120 = scmp.eq.s32.totalorder %s19, 1
      %p121 = por %p119, %p120
      %p122 = scmp.ne.s32.totalorder %s113, %s114
      %p123 = scmp.eq.s32.totalorder %s19, 0
      %p124 = por %p122, %p123
      %p125 = scmp.ne.s32.totalorder %s113, %s114
      %p126 = scmp.eq.s32.totalorder %s20, 1
      %p127 = por %p125, %p126
      %p129 = scmp.ne.s32.totalorder %s114, %s128
      %p130 = scmp.eq.s32.totalorder %s20, 0
      %p131 = por %p129, %p130
      %s132 = ssub.s32 %s14, %s21
      %p133 = scmp.eq.s32.totalorder %s132, 0
      %s135 = sadd.s32 %s134, 1
      %s136 = scalar_select %p133, %s134, %s135
      %p139 = pneg %p133
      %p140 = scmp.eq.s32.totalorder %s14, 1
      %p141 = por %p139, %p140
      %p142 = scmp.ne.s32.totalorder %s134, %s137
      %p143 = scmp.eq.s32.totalorder %s14, 0
      %p144 = por %p142, %p143
      %p145 = scmp.ne.s32.totalorder %s134, %s137
      %p146 = scmp.eq.s32.totalorder %s19, 1
      %p147 = por %p145, %p146
      %p148 = scmp.ne.s32.totalorder %s137, %s138
      %p149 = scmp.eq.s32.totalorder %s19, 0
      %p150 = por %p148, %p149
      %p151 = scmp.ne.s32.totalorder %s137, %s138
      %p152 = scmp.eq.s32.totalorder %s20, 1
      %p153 = por %p151, %p152
      %p155 = scmp.ne.s32.totalorder %s138, %s154
      %p156 = scmp.eq.s32.totalorder %s20, 0
      %p157 = por %p155, %p156
      %p158 = scmp.le.s32.totalorder 1, %s14
      %p159 = scmp.lt.s32.totalorder %s14, 3
      %p160 = pnand %p158, %p159
      %p161 = pneg %p160
      // Predicated region
      $region9: #{tpu_custom_call.1} parent=5 // pred_check
        _
      $region10: #{tpu_custom_call.1} parent=5 // pred_check_branch
        %163 = sbr.rel (%p160) target = $region12
      $region11: #{tpu_custom_call.1} parent=5 // pred_region
        %s164 = ssub.s32 %s14, 1
        // Predicated region
        $region13: #{tpu_custom_call.1} parent=11 // pred_check
          %p165 = pneg %p61
        $region14: #{tpu_custom_call.1} parent=11 // pred_check_branch
          %167 = sbr.rel (%p165) target = $region16
        $region15: #{tpu_custom_call.1} parent=11 // pred_region
          _
        $region16: #{tpu_custom_call.1} parent=11 // pred_fallthru
          _
        // Predicated region
        $region17: #{tpu_custom_call.1} parent=11 // pred_check
          %p168 = pneg %p82
        $region18: #{tpu_custom_call.1} parent=11 // pred_check_branch
          %170 = sbr.rel (%p168) target = $region20
        $region19: #{tpu_custom_call.1} parent=11 // pred_region
          _
        $region20: #{tpu_custom_call.1} parent=11 // pred_fallthru
          _
        // Predicated region
        $region21: #{tpu_custom_call.1} parent=11 // pred_check
          %p171 = pneg %p103
        $region22: #{tpu_custom_call.1} parent=11 // pred_check_branch
          %173 = sbr.rel (%p171) target = $region24
        $region23: #{tpu_custom_call.1} parent=11 // pred_region
          _
        $region24: #{tpu_custom_call.1} parent=11 // pred_fallthru
          _
        // Predicated region
        $region25: #{tpu_custom_call.1} parent=11 // pred_check
          %p174 = pneg %p124
        $region26: #{tpu_custom_call.1} parent=11 // pred_check_branch
          %176 = sbr.rel (%p174) target = $region28
        $region27: #{tpu_custom_call.1} parent=11 // pred_region
          _
        $region28: #{tpu_custom_call.1} parent=11 // pred_fallthru
          _
      $region12: #{tpu_custom_call.1} parent=5 // pred_fallthru
        _
      %p177 = scmp.lt.s32.totalorder %s14, 2
      // Predicated region
      $region29: #{tpu_custom_call.1} parent=5 // pred_check
        %p178 = pneg %p177
      $region30: #{tpu_custom_call.1} parent=5 // pred_check_branch
        %180 = sbr.rel (%p178) target = $region32
      $region31: #{tpu_custom_call.1} parent=5 // pred_region
        // Predicated region
        $region33: #{tpu_custom_call.1} parent=31 // pred_check
          %p181 = pneg %p34
        $region34: #{tpu_custom_call.1} parent=31 // pred_check_branch
          %183 = sbr.rel (%p181) target = $region36
        $region35: #{tpu_custom_call.1} parent=31 // pred_region
          %s184 = smul.u32 16, %s14
          %p185 = scmp.lt.s32.totalorder %s184, 31
          %s186 = scalar_select %p185, %s184, 31
          %s187 = smul.addr %s186, 8
          %s188 = scalar_lea.vmem %s0, %s187
          %s189 = smul.u32 16, %s14
        $region36: #{tpu_custom_call.1} parent=31 // pred_fallthru
          _
      $region32: #{tpu_custom_call.1} parent=5 // pred_fallthru
        _
      %p190 = scmp.le.s32.totalorder 1, %s14
      %p191 = scmp.lt.s32.totalorder %s14, 3
      %p192 = pnand %p190, %p191
      %p193 = pneg %p192
      // Predicated region
      $region37: #{tpu_custom_call.1} parent=5 // pred_check
        _
      $region38: #{tpu_custom_call.1} parent=5 // pred_check_branch
        %195 = sbr.rel (%p192) target = $region40
      $region39: #{tpu_custom_call.1} parent=5 // pred_region
        %s196 = ssub.s32 %s14, 1
        %s197 = smul.u32 16, %s19
        %p198 = scmp.lt.s32.totalorder %s197, 31
        %s199 = scalar_select %p198, %s197, 31
        %s200 = smul.addr %s199, 8
        %s201 = scalar_lea.vmem %s0, %s200
        %p202 = pneg %p40
        %p203 = pneg %p37
        %p204 = pneg %p61
        %p205 = pneg %p58
        %p206 = pneg %p82
        %p207 = pneg %p79
        %p208 = pneg %p103
        %p209 = pneg %p100
        %p210 = pneg %p124
        %p211 = pneg %p121
        %p212 = pneg %p150
        %p213 = pneg %p147
        %s214 = sand.u32 %s137, 1
        %s215 = scalar_lea.sflag [#allocation3], %s214
        %s216 = sand.u32 %s137, 1
        %s217 = smul.addr %s216, 8
        %s218 = scalar_lea.vmem [#allocation2], %s217
        %s219 = smul.u32 16, %s19
        %p220 = scmp.lt.s32.totalorder %s219, 31
        %s221 = scalar_select %p220, %s219, 31
        %s222 = smul.addr %s221, 8
        %s223 = scalar_lea.vmem %s0, %s222
        %s224 = smul.u32 16, %s19
        %v225 = vld [vmem:[%s223] sm:$0xff]
        %v226 = vld [vmem:[%s223 + $0x8] sm:$0xff]
        %v227 = vld [vmem:[%s223 + $0x10] sm:$0xff]
        %v228 = vld [vmem:[%s223 + $0x18] sm:$0xff]
        %v229 = vld [vmem:[%s223 + $0x20] sm:$0xff]
        %v230 = vld [vmem:[%s223 + $0x28] sm:$0xff]
        %v231 = vld [vmem:[%s223 + $0x30] sm:$0xff]
        %v232 = vld [vmem:[%s223 + $0x38] sm:$0xff]
        %v233 = vld [vmem:[%s223 + $0x40] sm:$0xff]
        %v234 = vld [vmem:[%s223 + $0x48] sm:$0xff]
        %v235 = vld [vmem:[%s223 + $0x50] sm:$0xff]
        %v236 = vld [vmem:[%s223 + $0x58] sm:$0xff]
        %v237 = vld [vmem:[%s223 + $0x60] sm:$0xff]
        %v238 = vld [vmem:[%s223 + $0x68] sm:$0xff]
        %v239 = vld [vmem:[%s223 + $0x70] sm:$0xff]
        %v240 = vld [vmem:[%s223 + $0x78] sm:$0xff]
        %v241 = vld [vmem:[%s1] sm:$0xff]
        %v242 = vld [vmem:[%s1 + $0x8] sm:$0x3]
        %v243 = vld [vmem:[%s3] sm:$0x1f]
        %v244 = vld [vmem:[%s2] sm:$0xff]
        %v245 = vld [vmem:[%s2 + $0x8] sm:$0x3]
        %247 = vset.pattern.permute.xlu0 0
        %248 = vperm.xlu0 %247, %v244
        %v249 = vpop.permute.xlu0 %248
        %252 = vset.pattern.permute.xlu0 0
        %253 = vperm.xlu0 %252, %v245
        %v254 = vpop.permute.xlu0 %253
        %vm256 = vcmask 23552
        %v258 = vsel %vm256, %v241, 0
        %v261 = vsel %vm256, %v242, 0
        %v264 = vsel %vm256, %v225, 0
        %v267 = vsel %vm256, %v226, 0
        %v270 = vsel %vm256, %v227, 0
        %v273 = vsel %vm256, %v228, 0
        %v276 = vsel %vm256, %v229, 0
        %v279 = vsel %vm256, %v230, 0
        %v282 = vsel %vm256, %v231, 0
        %v285 = vsel %vm256, %v232, 0
        %v288 = vsel %vm256, %v233, 0
        %v291 = vsel %vm256, %v234, 0
        %v294 = vsel %vm256, %v235, 0
        %v297 = vsel %vm256, %v236, 0
        %v300 = vsel %vm256, %v237, 0
        %v303 = vsel %vm256, %v238, 0
        %v306 = vsel %vm256, %v239, 0
        %v309 = vsel %vm256, %v240, 0
        %v311 = vand.u32 %v309, 4294901760
        %312 = vmatpush.xpose.msra.mxu0 %v311
        %v313 = vand.u32 %v306, 4294901760
        %314 = vmatpush.xpose.msra.mxu0 %v313
        %v315 = vand.u32 %v303, 4294901760
        %316 = vmatpush.xpose.msra.mxu0 %v315
        %v317 = vand.u32 %v300, 4294901760
        %318 = vmatpush.xpose.msra.mxu0 %v317
        %v319 = vand.u32 %v297, 4294901760
        %320 = vmatpush.xpose.msra.mxu0 %v319
        %v321 = vand.u32 %v294, 4294901760
        %322 = vmatpush.xpose.msra.mxu0 %v321
        %v323 = vand.u32 %v291, 4294901760
        %324 = vmatpush.xpose.msra.mxu0 %v323
        %v325 = vand.u32 %v288, 4294901760
        %326 = vmatpush.xpose.msra.mxu0 %v325
        %v327 = vand.u32 %v285, 4294901760
        %328 = vmatpush.xpose.msra.mxu0 %v327
        %v329 = vand.u32 %v282, 4294901760
        %330 = vmatpush.xpose.msra.mxu0 %v329
        %v331 = vand.u32 %v279, 4294901760
        %332 = vmatpush.xpose.msra.mxu0 %v331
        %v333 = vand.u32 %v276, 4294901760
        %334 = vmatpush.xpose.msra.mxu0 %v333
        %v335 = vand.u32 %v273, 4294901760
        %336 = vmatpush.xpose.msra.mxu0 %v335
        %v337 = vand.u32 %v270, 4294901760
        %338 = vmatpush.xpose.msra.mxu0 %v337
        %v339 = vand.u32 %v267, 4294901760
        %340 = vmatpush.xpose.msra.mxu0 %v339
        %v341 = vand.u32 %v264, 4294901760
        %342 = vmatpush.xpose.msra.mxu0 %v341
        %v343 = vand.u32 %v258, 4294901760
        %v344 = vsub.f32 %v258, %v343
        %v345 = vand.u32 %v344, 4294901760
        %v346 = vsub.f32 %v344, %v345
        %v347 = vand.u32 %v346, 4294901760
        %348 = vmatmul.f32.gmra.mxu0 %v347
        %v349 = vpop.f32.mrf.mxu0
        %v350 = vadd.f32 %v249, %v349
        %v351 = vand.u32 %v261, 4294901760
        %v352 = vsub.f32 %v261, %v351
        %v353 = vand.u32 %v352, 4294901760
        %v354 = vsub.f32 %v352, %v353
        %v355 = vand.u32 %v354, 4294901760
        %356 = vmatmul.f32.gmra.mxu0 %v355
        %v357 = vpop.f32.mrf.mxu0
        %v358 = vadd.f32 %v254, %v357
        %359 = vdwg.mxu0
        %v360 = vand.u32 %v309, 4294901760
        %v361 = vsub.f32 %v309, %v360
        %v362 = vand.u32 %v361, 4294901760
        %v363 = vsub.f32 %v361, %v362
        %v364 = vand.u32 %v363, 4294901760
        %365 = vmatpush.xpose.msra.mxu0 %v364
        %v366 = vand.u32 %v306, 4294901760
        %v367 = vsub.f32 %v306, %v366
        %v368 = vand.u32 %v367, 4294901760
        %v369 = vsub.f32 %v367, %v368
        %v370 = vand.u32 %v369, 4294901760
        %371 = vmatpush.xpose.msra.mxu0 %v370
        %v372 = vand.u32 %v303, 4294901760
        %v373 = vsub.f32 %v303, %v372
        %v374 = vand.u32 %v373, 4294901760
        %v375 = vsub.f32 %v373, %v374
        %v376 = vand.u32 %v375, 4294901760
        %377 = vmatpush.xpose.msra.mxu0 %v376
        %v378 = vand.u32 %v300, 4294901760
        %v379 = vsub.f32 %v300, %v378
        %v380 = vand.u32 %v379, 4294901760
        %v381 = vsub.f32 %v379, %v380
        %v382 = vand.u32 %v381, 4294901760
        %383 = vmatpush.xpose.msra.mxu0 %v382
        %v384 = vand.u32 %v297, 4294901760
        %v385 = vsub.f32 %v297, %v384
        %v386 = vand.u32 %v385, 4294901760
        %v387 = vsub.f32 %v385, %v386
        %v388 = vand.u32 %v387, 4294901760
        %389 = vmatpush.xpose.msra.mxu0 %v388
        %v390 = vand.u32 %v294, 4294901760
        %v391 = vsub.f32 %v294, %v390
        %v392 = vand.u32 %v391, 4294901760
        %v393 = vsub.f32 %v391, %v392
        %v394 = vand.u32 %v393, 4294901760
        %395 = vmatpush.xpose.msra.mxu0 %v394
        %v396 = vand.u32 %v291, 4294901760
        %v397 = vsub.f32 %v291, %v396
        %v398 = vand.u32 %v397, 4294901760
        %v399 = vsub.f32 %v397, %v398
        %v400 = vand.u32 %v399, 4294901760
        %401 = vmatpush.xpose.msra.mxu0 %v400
        %v402 = vand.u32 %v288, 4294901760
        %v403 = vsub.f32 %v288, %v402
        %v404 = vand.u32 %v403, 4294901760
        %v405 = vsub.f32 %v403, %v404
        %v406 = vand.u32 %v405, 4294901760
        %407 = vmatpush.xpose.msra.mxu0 %v406
        %v408 = vand.u32 %v285, 4294901760
        %v409 = vsub.f32 %v285, %v408
        %v410 = vand.u32 %v409, 4294901760
        %v411 = vsub.f32 %v409, %v410
        %v412 = vand.u32 %v411, 4294901760
        %413 = vmatpush.xpose.msra.mxu0 %v412
        %v414 = vand.u32 %v282, 4294901760
        %v415 = vsub.f32 %v282, %v414
        %v416 = vand.u32 %v415, 4294901760
        %v417 = vsub.f32 %v415, %v416
        %v418 = vand.u32 %v417, 4294901760
        %419 = vmatpush.xpose.msra.mxu0 %v418
        %v420 = vand.u32 %v279, 4294901760
        %v421 = vsub.f32 %v279, %v420
        %v422 = vand.u32 %v421, 4294901760
        %v423 = vsub.f32 %v421, %v422
        %v424 = vand.u32 %v423, 4294901760
        %425 = vmatpush.xpose.msra.mxu0 %v424
        %v426 = vand.u32 %v276, 4294901760
        %v427 = vsub.f32 %v276, %v426
        %v428 = vand.u32 %v427, 4294901760
        %v429 = vsub.f32 %v427, %v428
        %v430 = vand.u32 %v429, 4294901760
        %431 = vmatpush.xpose.msra.mxu0 %v430
        %v432 = vand.u32 %v273, 4294901760
        %v433 = vsub.f32 %v273, %v432
        %v434 = vand.u32 %v433, 4294901760
        %v435 = vsub.f32 %v433, %v434
        %v436 = vand.u32 %v435, 4294901760
        %437 = vmatpush.xpose.msra.mxu0 %v436
        %v438 = vand.u32 %v270, 4294901760
        %v439 = vsub.f32 %v270, %v438
        %v440 = vand.u32 %v439, 4294901760
        %v441 = vsub.f32 %v439, %v440
        %v442 = vand.u32 %v441, 4294901760
        %443 = vmatpush.xpose.msra.mxu0 %v442
        %v444 = vand.u32 %v267, 4294901760
        %v445 = vsub.f32 %v267, %v444
        %v446 = vand.u32 %v445, 4294901760
        %v447 = vsub.f32 %v445, %v446
        %v448 = vand.u32 %v447, 4294901760
        %449 = vmatpush.xpose.msra.mxu0 %v448
        %v450 = vand.u32 %v264, 4294901760
        %v451 = vsub.f32 %v264, %v450
        %v452 = vand.u32 %v451, 4294901760
        %v453 = vsub.f32 %v451, %v452
        %v454 = vand.u32 %v453, 4294901760
        %455 = vmatpush.xpose.msra.mxu0 %v454
        %v456 = vand.u32 %v258, 4294901760
        %457 = vmatmul.f32.gmra.mxu0 %v456
        %v458 = vpop.f32.mrf.mxu0
        %v459 = vadd.f32 %v350, %v458
        %v460 = vand.u32 %v261, 4294901760
        %461 = vmatmul.f32.gmra.mxu0 %v460
        %v462 = vpop.f32.mrf.mxu0
        %v463 = vadd.f32 %v358, %v462
        %464 = vdwg.mxu0
        %v465 = vand.u32 %v309, 4294901760
        %v466 = vsub.f32 %v309, %v465
        %467 = vmatpush.xpose.msra.mxu0 %v466
        %v468 = vand.u32 %v306, 4294901760
        %v469 = vsub.f32 %v306, %v468
        %470 = vmatpush.xpose.msra.mxu0 %v469
        %v471 = vand.u32 %v303, 4294901760
        %v472 = vsub.f32 %v303, %v471
        %473 = vmatpush.xpose.msra.mxu0 %v472
        %v474 = vand.u32 %v300, 4294901760
        %v475 = vsub.f32 %v300, %v474
        %476 = vmatpush.xpose.msra.mxu0 %v475
        %v477 = vand.u32 %v297, 4294901760
        %v478 = vsub.f32 %v297, %v477
        %479 = vmatpush.xpose.msra.mxu0 %v478
        %v480 = vand.u32 %v294, 4294901760
        %v481 = vsub.f32 %v294, %v480
        %482 = vmatpush.xpose.msra.mxu0 %v481
        %v483 = vand.u32 %v291, 4294901760
        %v484 = vsub.f32 %v291, %v483
        %485 = vmatpush.xpose.msra.mxu0 %v484
        %v486 = vand.u32 %v288, 4294901760
        %v487 = vsub.f32 %v288, %v486
        %488 = vmatpush.xpose.msra.mxu0 %v487
        %v489 = vand.u32 %v285, 4294901760
        %v490 = vsub.f32 %v285, %v489
        %491 = vmatpush.xpose.msra.mxu0 %v490
        %v492 = vand.u32 %v282, 4294901760
        %v493 = vsub.f32 %v282, %v492
        %494 = vmatpush.xpose.msra.mxu0 %v493
        %v495 = vand.u32 %v279, 4294901760
        %v496 = vsub.f32 %v279, %v495
        %497 = vmatpush.xpose.msra.mxu0 %v496
        %v498 = vand.u32 %v276, 4294901760
        %v499 = vsub.f32 %v276, %v498
        %500 = vmatpush.xpose.msra.mxu0 %v499
        %v501 = vand.u32 %v273, 4294901760
        %v502 = vsub.f32 %v273, %v501
        %503 = vmatpush.xpose.msra.mxu0 %v502
        %v504 = vand.u32 %v270, 4294901760
        %v505 = vsub.f32 %v270, %v504
        %506 = vmatpush.xpose.msra.mxu0 %v505
        %v507 = vand.u32 %v267, 4294901760
        %v508 = vsub.f32 %v267, %v507
        %509 = vmatpush.xpose.msra.mxu0 %v508
        %v510 = vand.u32 %v264, 4294901760
        %v511 = vsub.f32 %v264, %v510
        %512 = vmatpush.xpose.msra.mxu0 %v511
        %v513 = vand.u32 %v258, 4294901760
        %v514 = vsub.f32 %v258, %v513
        %515 = vmatmul.f32.gmra.mxu0 %v514
        %v516 = vpop.f32.mrf.mxu0
        %v517 = vadd.f32 %v459, %v516
        %v518 = vand.u32 %v261, 4294901760
        %v519 = vsub.f32 %v261, %v518
        %520 = vmatmul.f32.gmra.mxu0 %v519
        %v521 = vpop.f32.mrf.mxu0
        %v522 = vadd.f32 %v463, %v521
        %523 = vdwg.mxu0
        %v524 = vand.u32 %v309, 4294901760
        %525 = vmatpush.xpose.msra.mxu0 %v524
        %v526 = vand.u32 %v306, 4294901760
        %527 = vmatpush.xpose.msra.mxu0 %v526
        %v528 = vand.u32 %v303, 4294901760
        %529 = vmatpush.xpose.msra.mxu0 %v528
        %v530 = vand.u32 %v300, 4294901760
        %531 = vmatpush.xpose.msra.mxu0 %v530
        %v532 = vand.u32 %v297, 4294901760
        %533 = vmatpush.xpose.msra.mxu0 %v532
        %v534 = vand.u32 %v294, 4294901760
        %535 = vmatpush.xpose.msra.mxu0 %v534
        %v536 = vand.u32 %v291, 4294901760
        %537 = vmatpush.xpose.msra.mxu0 %v536
        %v538 = vand.u32 %v288, 4294901760
        %539 = vmatpush.xpose.msra.mxu0 %v538
        %v540 = vand.u32 %v285, 4294901760
        %541 = vmatpush.xpose.msra.mxu0 %v540
        %v542 = vand.u32 %v282, 4294901760
        %543 = vmatpush.xpose.msra.mxu0 %v542
        %v544 = vand.u32 %v279, 4294901760
        %545 = vmatpush.xpose.msra.mxu0 %v544
        %v546 = vand.u32 %v276, 4294901760
        %547 = vmatpush.xpose.msra.mxu0 %v546
        %v548 = vand.u32 %v273, 4294901760
        %549 = vmatpush.xpose.msra.mxu0 %v548
        %v550 = vand.u32 %v270, 4294901760
        %551 = vmatpush.xpose.msra.mxu0 %v550
        %v552 = vand.u32 %v267, 4294901760
        %553 = vmatpush.xpose.msra.mxu0 %v552
        %v554 = vand.u32 %v264, 4294901760
        %555 = vmatpush.xpose.msra.mxu0 %v554
        %v556 = vand.u32 %v258, 4294901760
        %v557 = vsub.f32 %v258, %v556
        %v558 = vand.u32 %v557, 4294901760
        %559 = vmatmul.f32.gmra.mxu0 %v558
        %v560 = vpop.f32.mrf.mxu0
        %v561 = vadd.f32 %v517, %v560
        %v562 = vand.u32 %v261, 4294901760
        %v563 = vsub.f32 %v261, %v562
        %v564 = vand.u32 %v563, 4294901760
        %565 = vmatmul.f32.gmra.mxu0 %v564
        %v566 = vpop.f32.mrf.mxu0
        %v567 = vadd.f32 %v522, %v566
        %568 = vdwg.mxu0
        %v569 = vand.u32 %v309, 4294901760
        %v570 = vsub.f32 %v309, %v569
        %v571 = vand.u32 %v570, 4294901760
        %572 = vmatpush.xpose.msra.mxu0 %v571
        %v573 = vand.u32 %v306, 4294901760
        %v574 = vsub.f32 %v306, %v573
        %v575 = vand.u32 %v574, 4294901760
        %576 = vmatpush.xpose.msra.mxu0 %v575
        %v577 = vand.u32 %v303, 4294901760
        %v578 = vsub.f32 %v303, %v577
        %v579 = vand.u32 %v578, 4294901760
        %580 = vmatpush.xpose.msra.mxu0 %v579
        %v581 = vand.u32 %v300, 4294901760
        %v582 = vsub.f32 %v300, %v581
        %v583 = vand.u32 %v582, 4294901760
        %584 = vmatpush.xpose.msra.mxu0 %v583
        %v585 = vand.u32 %v297, 4294901760
        %v586 = vsub.f32 %v297, %v585
        %v587 = vand.u32 %v586, 4294901760
        %588 = vmatpush.xpose.msra.mxu0 %v587
        %v589 = vand.u32 %v294, 4294901760
        %v590 = vsub.f32 %v294, %v589
        %v591 = vand.u32 %v590, 4294901760
        %592 = vmatpush.xpose.msra.mxu0 %v591
        %v593 = vand.u32 %v291, 4294901760
        %v594 = vsub.f32 %v291, %v593
        %v595 = vand.u32 %v594, 4294901760
        %596 = vmatpush.xpose.msra.mxu0 %v595
        %v597 = vand.u32 %v288, 4294901760
        %v598 = vsub.f32 %v288, %v597
        %v599 = vand.u32 %v598, 4294901760
        %600 = vmatpush.xpose.msra.mxu0 %v599
        %v601 = vand.u32 %v285, 4294901760
        %v602 = vsub.f32 %v285, %v601
        %v603 = vand.u32 %v602, 4294901760
        %604 = vmatpush.xpose.msra.mxu0 %v603
        %v605 = vand.u32 %v282, 4294901760
        %v606 = vsub.f32 %v282, %v605
        %v607 = vand.u32 %v606, 4294901760
        %608 = vmatpush.xpose.msra.mxu0 %v607
        %v609 = vand.u32 %v279, 4294901760
        %v610 = vsub.f32 %v279, %v609
        %v611 = vand.u32 %v610, 4294901760
        %612 = vmatpush.xpose.msra.mxu0 %v611
        %v613 = vand.u32 %v276, 4294901760
        %v614 = vsub.f32 %v276, %v613
        %v615 = vand.u32 %v614, 4294901760
        %616 = vmatpush.xpose.msra.mxu0 %v615
        %v617 = vand.u32 %v273, 4294901760
        %v618 = vsub.f32 %v273, %v617
        %v619 = vand.u32 %v618, 4294901760
        %620 = vmatpush.xpose.msra.mxu0 %v619
        %v621 = vand.u32 %v270, 4294901760
        %v622 = vsub.f32 %v270, %v621
        %v623 = vand.u32 %v622, 4294901760
        %624 = vmatpush.xpose.msra.mxu0 %v623
        %v625 = vand.u32 %v267, 4294901760
        %v626 = vsub.f32 %v267, %v625
        %v627 = vand.u32 %v626, 4294901760
        %628 = vmatpush.xpose.msra.mxu0 %v627
        %v629 = vand.u32 %v264, 4294901760
        %v630 = vsub.f32 %v264, %v629
        %v631 = vand.u32 %v630, 4294901760
        %632 = vmatpush.xpose.msra.mxu0 %v631
        %v633 = vand.u32 %v258, 4294901760
        %634 = vmatmul.f32.gmra.mxu0 %v633
        %v635 = vpop.f32.mrf.mxu0
        %v636 = vadd.f32 %v561, %v635
        %v637 = vand.u32 %v261, 4294901760
        %638 = vmatmul.f32.gmra.mxu0 %v637
        %v639 = vpop.f32.mrf.mxu0
        %v640 = vadd.f32 %v567, %v639
        %641 = vdwg.mxu0
        %v642 = vand.u32 %v309, 4294901760
        %643 = vmatpush.xpose.msra.mxu0 %v642
        %v644 = vand.u32 %v306, 4294901760
        %645 = vmatpush.xpose.msra.mxu0 %v644
        %v646 = vand.u32 %v303, 4294901760
        %647 = vmatpush.xpose.msra.mxu0 %v646
        %v648 = vand.u32 %v300, 4294901760
        %649 = vmatpush.xpose.msra.mxu0 %v648
        %v650 = vand.u32 %v297, 4294901760
        %651 = vmatpush.xpose.msra.mxu0 %v650
        %v652 = vand.u32 %v294, 4294901760
        %653 = vmatpush.xpose.msra.mxu0 %v652
        %v654 = vand.u32 %v291, 4294901760
        %655 = vmatpush.xpose.msra.mxu0 %v654
        %v656 = vand.u32 %v288, 4294901760
        %657 = vmatpush.xpose.msra.mxu0 %v656
        %v658 = vand.u32 %v285, 4294901760
        %659 = vmatpush.xpose.msra.mxu0 %v658
        %v660 = vand.u32 %v282, 4294901760
        %661 = vmatpush.xpose.msra.mxu0 %v660
        %v662 = vand.u32 %v279, 4294901760
        %663 = vmatpush.xpose.msra.mxu0 %v662
        %v664 = vand.u32 %v276, 4294901760
        %665 = vmatpush.xpose.msra.mxu0 %v664
        %v666 = vand.u32 %v273, 4294901760
        %667 = vmatpush.xpose.msra.mxu0 %v666
        %v668 = vand.u32 %v270, 4294901760
        %669 = vmatpush.xpose.msra.mxu0 %v668
        %v670 = vand.u32 %v267, 4294901760
        %671 = vmatpush.xpose.msra.mxu0 %v670
        %v672 = vand.u32 %v264, 4294901760
        %673 = vmatpush.xpose.msra.mxu0 %v672
        %v674 = vand.u32 %v258, 4294901760
        %675 = vmatmul.f32.gmra.mxu0 %v674
        %v676 = vpop.f32.mrf.mxu0
        %v677 = vadd.f32 %v636, %v676
        %v678 = vand.u32 %v261, 4294901760
        %679 = vmatmul.f32.gmra.mxu0 %v678
        %v680 = vpop.f32.mrf.mxu0
        %v681 = vadd.f32 %v640, %v680
        %682 = vdwg.mxu0
        %v683 = vmax.f32 %v677, 0.0
        %v684 = vmax.f32 %v681, 0.0
        %v685 = vld [vmem:[%s4] sm:$0x1f]
        %687 = vset.pattern.permute.xlu0 0
        %688 = vperm.xlu0 %687, %v685
        %v689 = vpop.permute.xlu0 %688
        %vm691 = vcmask 80896
        %v693 = vsel %vm691, %v243, 0
        %vm695 = vcmask 1041408
        %v697 = vsel %vm695, %v684, 0
        %699 = vmatpush.msra.mxu0 0.0
        %700 = vmatpush.msra.mxu0 0.0
        %701 = vmatpush.msra.mxu0 0.0
        %702 = vmatpush.msra.mxu0 0.0
        %703 = vmatpush.msra.mxu0 0.0
        %704 = vmatpush.msra.mxu0 0.0
        %705 = vmatpush.msra.mxu0 0.0
        %706 = vmatpush.msra.mxu0 0.0
        %707 = vmatpush.msra.mxu0 0.0
        %708 = vmatpush.msra.mxu0 0.0
        %709 = vmatpush.msra.mxu0 0.0
        %710 = vmatpush.msra.mxu0 0.0
        %711 = vmatpush.msra.mxu0 0.0
        %712 = vmatpush.msra.mxu0 0.0
        %v713 = vand.u32 %v697, 4294901760
        %714 = vmatpush.msra.mxu0 %v713
        %v715 = vand.u32 %v683, 4294901760
        %716 = vmatpush.msra.mxu0 %v715
        %v717 = vand.u32 %v693, 4294901760
        %v718 = vsub.f32 %v693, %v717
        %v719 = vand.u32 %v718, 4294901760
        %v720 = vsub.f32 %v718, %v719
        %v721 = vand.u32 %v720, 4294901760
        %722 = vmatmul.f32.gmra.mxu0 %v721
        %v723 = vpop.f32.mrf.mxu0
        %v724 = vadd.f32 %v689, %v723
        %725 = vdwg.mxu0
        %726 = vmatpush.msra.mxu0 0.0
        %727 = vmatpush.msra.mxu0 0.0
        %728 = vmatpush.msra.mxu0 0.0
        %729 = vmatpush.msra.mxu0 0.0
        %730 = vmatpush.msra.mxu0 0.0
        %731 = vmatpush.msra.mxu0 0.0
        %732 = vmatpush.msra.mxu0 0.0
        %733 = vmatpush.msra.mxu0 0.0
        %734 = vmatpush.msra.mxu0 0.0
        %735 = vmatpush.msra.mxu0 0.0
        %736 = vmatpush.msra.mxu0 0.0
        %737 = vmatpush.msra.mxu0 0.0
        %738 = vmatpush.msra.mxu0 0.0
        %739 = vmatpush.msra.mxu0 0.0
        %v740 = vand.u32 %v697, 4294901760
        %v741 = vsub.f32 %v697, %v740
        %v742 = vand.u32 %v741, 4294901760
        %v743 = vsub.f32 %v741, %v742
        %v744 = vand.u32 %v743, 4294901760
        %745 = vmatpush.msra.mxu0 %v744
        %v746 = vand.u32 %v683, 4294901760
        %v747 = vsub.f32 %v683, %v746
        %v748 = vand.u32 %v747, 4294901760
        %v749 = vsub.f32 %v747, %v748
        %v750 = vand.u32 %v749, 4294901760
        %751 = vmatpush.msra.mxu0 %v750
        %v752 = vand.u32 %v693, 4294901760
        %753 = vmatmul.f32.gmra.mxu0 %v752
        %v754 = vpop.f32.mrf.mxu0
        %v755 = vadd.f32 %v724, %v754
        %756 = vdwg.mxu0
        %757 = vmatpush.msra.mxu0 0.0
        %758 = vmatpush.msra.mxu0 0.0
        %759 = vmatpush.msra.mxu0 0.0
        %760 = vmatpush.msra.mxu0 0.0
        %761 = vmatpush.msra.mxu0 0.0
        %762 = vmatpush.msra.mxu0 0.0
        %763 = vmatpush.msra.mxu0 0.0
        %764 = vmatpush.msra.mxu0 0.0
        %765 = vmatpush.msra.mxu0 0.0
        %766 = vmatpush.msra.mxu0 0.0
        %767 = vmatpush.msra.mxu0 0.0
        %768 = vmatpush.msra.mxu0 0.0
        %769 = vmatpush.msra.mxu0 0.0
        %770 = vmatpush.msra.mxu0 0.0
        %v771 = vand.u32 %v697, 4294901760
        %v772 = vsub.f32 %v697, %v771
        %773 = vmatpush.msra.mxu0 %v772
        %v774 = vand.u32 %v683, 4294901760
        %v775 = vsub.f32 %v683, %v774
        %776 = vmatpush.msra.mxu0 %v775
        %v777 = vand.u32 %v693, 4294901760
        %v778 = vsub.f32 %v693, %v777
        %779 = vmatmul.f32.gmra.mxu0 %v778
        %v780 = vpop.f32.mrf.mxu0
        %v781 = vadd.f32 %v755, %v780
        %782 = vdwg.mxu0
        %783 = vmatpush.msra.mxu0 0.0
        %784 = vmatpush.msra.mxu0 0.0
        %785 = vmatpush.msra.mxu0 0.0
        %786 = vmatpush.msra.mxu0 0.0
        %787 = vmatpush.msra.mxu0 0.0
        %788 = vmatpush.msra.mxu0 0.0
        %789 = vmatpush.msra.mxu0 0.0
        %790 = vmatpush.msra.mxu0 0.0
        %791 = vmatpush.msra.mxu0 0.0
        %792 = vmatpush.msra.mxu0 0.0
        %793 = vmatpush.msra.mxu0 0.0
        %794 = vmatpush.msra.mxu0 0.0
        %795 = vmatpush.msra.mxu0 0.0
        %796 = vmatpush.msra.mxu0 0.0
        %v797 = vand.u32 %v697, 4294901760
        %798 = vmatpush.msra.mxu0 %v797
        %v799 = vand.u32 %v683, 4294901760
        %800 = vmatpush.msra.mxu0 %v799
        %v801 = vand.u32 %v693, 4294901760
        %v802 = vsub.f32 %v693, %v801
        %v803 = vand.u32 %v802, 4294901760
        %804 = vmatmul.f32.gmra.mxu0 %v803
        %v805 = vpop.f32.mrf.mxu0
        %v806 = vadd.f32 %v781, %v805
        %807 = vdwg.mxu0
        %808 = vmatpush.msra.mxu0 0.0
        %809 = vmatpush.msra.mxu0 0.0
        %810 = vmatpush.msra.mxu0 0.0
        %811 = vmatpush.msra.mxu0 0.0
        %812 = vmatpush.msra.mxu0 0.0
        %813 = vmatpush.msra.mxu0 0.0
        %814 = vmatpush.msra.mxu0 0.0
        %815 = vmatpush.msra.mxu0 0.0
        %816 = vmatpush.msra.mxu0 0.0
        %817 = vmatpush.msra.mxu0 0.0
        %818 = vmatpush.msra.mxu0 0.0
        %819 = vmatpush.msra.mxu0 0.0
        %820 = vmatpush.msra.mxu0 0.0
        %821 = vmatpush.msra.mxu0 0.0
        %v822 = vand.u32 %v697, 4294901760
        %v823 = vsub.f32 %v697, %v822
        %v824 = vand.u32 %v823, 4294901760
        %825 = vmatpush.msra.mxu0 %v824
        %v826 = vand.u32 %v683, 4294901760
        %v827 = vsub.f32 %v683, %v826
        %v828 = vand.u32 %v827, 4294901760
        %829 = vmatpush.msra.mxu0 %v828
        %v830 = vand.u32 %v693, 4294901760
        %831 = vmatmul.f32.gmra.mxu0 %v830
        %v832 = vpop.f32.mrf.mxu0
        %v833 = vadd.f32 %v806, %v832
        %834 = vdwg.mxu0
        %835 = vmatpush.msra.mxu0 0.0
        %836 = vmatpush.msra.mxu0 0.0
        %837 = vmatpush.msra.mxu0 0.0
        %838 = vmatpush.msra.mxu0 0.0
        %839 = vmatpush.msra.mxu0 0.0
        %840 = vmatpush.msra.mxu0 0.0
        %841 = vmatpush.msra.mxu0 0.0
        %842 = vmatpush.msra.mxu0 0.0
        %843 = vmatpush.msra.mxu0 0.0
        %844 = vmatpush.msra.mxu0 0.0
        %845 = vmatpush.msra.mxu0 0.0
        %846 = vmatpush.msra.mxu0 0.0
        %847 = vmatpush.msra.mxu0 0.0
        %848 = vmatpush.msra.mxu0 0.0
        %v849 = vand.u32 %v697, 4294901760
        %850 = vmatpush.msra.mxu0 %v849
        %v851 = vand.u32 %v683, 4294901760
        %852 = vmatpush.msra.mxu0 %v851
        %v853 = vand.u32 %v693, 4294901760
        %854 = vmatmul.f32.gmra.mxu0 %v853
        %v855 = vpop.f32.mrf.mxu0
        %v856 = vadd.f32 %v833, %v855
        %857 = vdwg.mxu0
        %858 = vst [vmem:[%s218] sm:$0x1f] %v856
        %s859 = sand.u32 %s137, 1
        %s860 = scalar_lea.sflag [#allocation3], %s859
        %s861 = sand.u32 %s137, 1
        %s862 = smul.addr %s861, 8
        %s863 = scalar_lea.vmem [#allocation2], %s862
        // Predicated region
        $region41: #{tpu_custom_call.1} parent=39 // pred_check
          %p864 = pneg %p147
        $region42: #{tpu_custom_call.1} parent=39 // pred_check_branch
          %866 = sbr.rel (%p864) target = $region44
        $region43: #{tpu_custom_call.1} parent=39 // pred_region
          %868 = vsyncadd %s860, 0
          %s869 = smul.addr %s19, 8
          %s870 = scalar_lea.hbm %s5, %s869
          %s872 = sshll.u32 %s863, 4
          %s873 = int_to_ptr.vmem [resolvable:$true] %s872
          %s874 = sshll.u32 %s870, 4
          %s875 = int_to_ptr.hbm [resolvable:$true] %s874
          %877 = dma.vmem_to_hbm [thread:$0]  %s873, 128, %s875, %s860
        $region44: #{tpu_custom_call.1} parent=39 // pred_fallthru
          _
      $region40: #{tpu_custom_call.1} parent=5 // pred_fallthru
        _
      %p878 = scmp.le.s32.totalorder 2, %s14
      // Predicated region
      $region45: #{tpu_custom_call.1} parent=5 // pred_check
        %p879 = pneg %p878
      $region46: #{tpu_custom_call.1} parent=5 // pred_check_branch
        %881 = sbr.rel (%p879) target = $region48
      $region47: #{tpu_custom_call.1} parent=5 // pred_region
        %s882 = ssub.s32 %s14, 2
        // Predicated region
        $region49: #{tpu_custom_call.1} parent=47 // pred_check
          %p883 = pneg %p153
        $region50: #{tpu_custom_call.1} parent=47 // pred_check_branch
          %885 = sbr.rel (%p883) target = $region52
        $region51: #{tpu_custom_call.1} parent=47 // pred_region
          %s886 = sand.u32 %s138, 1
          %s887 = scalar_lea.sflag [#allocation3], %s886
          %s888 = sand.u32 %s138, 1
          %s889 = smul.addr %s888, 8
          %s890 = scalar_lea.vmem [#allocation2], %s889
          %892 = dma.done %s887, 128
        $region52: #{tpu_custom_call.1} parent=47 // pred_fallthru
          _
      $region48: #{tpu_custom_call.1} parent=5 // pred_fallthru
        _
    $region6: #{tpu_custom_call.1} parent=1 // loop_footer
      %s18 = sadd.s32 1, %s14
    $region7: #{tpu_custom_call.1} parent=1 // loop_footer_branch
      %13 = sbr.rel target = $region3
    $region8: #{tpu_custom_call.1} parent=1 // loop_exit
      _
    %893 = vsyncpa [#allocation3], 1
    %s894 = scalar_lea.sflag [#allocation3], 1
    %895 = vsyncpa %s894, 1

</llo_original>
